<compile_context>
chip_gen: v7x
topology: tpu7x:2x2x1
jax: 0.10.0
libtpu: 0.0.40
codegen_flags: <defaults>
</compile_context>

<pallas_src>
import jax
import jax.numpy as jnp
from jax import lax
from jax.experimental import pallas as pl
from jax.experimental.pallas import tpu as pltpu


def _make_batch_criterion_kernel(negM: float, T: float, B: int, tile_b: int):
    negM = float(negM)
    inv_T = 1.0 / float(T)
    half = B // 2
    eps = 1e-10
    row_aligned = (tile_b % 8 == 0)

    def kernel(x_ref, out_ref):
        i = pl.program_id(0)

        x_full = x_ref[...]                       # [B, D] resident every step
        if tile_b == B:
            x_rows = x_full
        else:
            row0 = i * tile_b
            if row_aligned:
                row0 = pl.multiple_of(row0, 8)    # aligned sublane slice
            x_rows = x_ref[pl.ds(row0, tile_b), :]          # [tile_b, D]

        # Row slab of the Gram matrix on the MXU (contraction over D, no
        # materialized x.T), f32 accumulation; 1/T folded as one constant mul.
        sim = lax.dot_general(
            x_rows, x_full,
            dimension_numbers=(((1,), (1,)), ((), ())),
            preferred_element_type=jnp.float32,
        ) * inv_T                                            # [tile_b, B] f32

        # Single (global_row - col) array drives both masks:
        #   diagonal:       diff == 0
        #   positive pair:  col == (row + half) % B  <=>  diff == +/-half
        diff = (lax.broadcasted_iota(jnp.int32, (tile_b, B), 0)
                - lax.broadcasted_iota(jnp.int32, (tile_b, B), 1)
                + i * tile_b)

        # exp fused into the diagonal-zeroed matrix (no standalone `e` temp).
        all_prob = jnp.where(diff == 0, 0.0, jnp.exp(sim))  # [tile_b, B]
        pair = (diff == half) | (diff == -half)

        pos = jnp.sum(jnp.where(pair, all_prob, 0.0),
                      axis=1, keepdims=True)                 # [tile_b, 1]
        # exact log(pos): the pair logit itself (pos == exp(sim_pair))
        sim_pair = jnp.sum(jnp.where(pair, sim, 0.0),
                           axis=1, keepdims=True)            # [tile_b, 1]

        row_sum = jnp.sum(all_prob, axis=1, keepdims=True)   # [tile_b, 1]
        if negM == 1.0:
            all_div = row_sum
        else:
            all_div = (row_sum - pos) * negM + pos

        d = all_div + eps
        inv_d = 1.0 / d                    # one exact per-row reciprocal
        log_d = jnp.log(d)

        # sum_i log(pos_i / d_i) == sum_i (sim_pair_i - log d_i)  (exact)
        lnPmt_sum = jnp.sum(sim_pair - log_d)

        # lnPon_i = sum_j log(1 - all_prob_ij/d_i) - log(1 - pos_i/d_i)
        # (diagonal entries contribute log(1) = 0; log(1-p) kept to mirror the
        #  torch reference; log1p(-p) would be slightly more accurate)
        lnPon_mat = jnp.log(1.0 - all_prob * inv_d)          # [tile_b, B]
        lnPon = (jnp.sum(lnPon_mat, axis=1, keepdims=True)
                 - jnp.log(1.0 - pos * inv_d))               # [tile_b, 1]

        partial = lnPmt_sum + negM * jnp.sum(lnPon)
        # Lane-dense (8,128) per-tile partial slab -> unmasked stores.
        out_ref[...] = jnp.full(out_ref.shape, partial, dtype=out_ref.dtype)

    return kernel


def _tpu_generation():
    """Best-effort chip generation ('v5'/'v6'/'v7') or None."""
    try:
        kind = jax.devices()[0].device_kind.lower()
    except Exception:
        return None
    for gen in ("v7", "v6", "v5"):
        if gen in kind:
            return gen
    return None


def _pick_row_tile(B: int, max_tile: int, row_align: int) -> int:
    """Largest row tile (multiple of row_align, divides B) <= max_tile, while
    keeping n_tiles >= 2 whenever possible so the parallel grid axis can be
    split across TensorCores (v7x megacore)."""
    cap = min(max_tile, max(row_align, B // 2))
    best = None
    t = row_align
    while t <= cap:
        if B % t == 0:
            best = t
        t += row_align
    if best is not None:
        return best
    # No aligned divisor: fall back to a single resident tile.  For large B
    # with no multiple-of-8 divisor this materializes O(B^2) intermediates in
    # one step — pad B (or add a ragged last tile) before using such shapes.
    return B


def _vmem_limit_bytes(B, D, tile_b, itemsize, gen) -> int:
    resident_x = 2 * B * D * itemsize          # worst case (double-buffered)
    slab = 6 * tile_b * B * 4                  # sim/all_prob/lnPon + masks
    out = 2 * 8 * 128 * 4
    need = resident_x + slab + out + (2 << 20)
    cap = {"v5": 100 << 20, "v6": 100 << 20, "v7": 56 << 20}.get(gen, 64 << 20)
    return int(min(max(need, 32 << 20), cap))


def batch_criterion(x, negM: float, T: float, *, gram_in_bf16: bool = False):
    """Pallas implementation of BatchCriterion.forward.  x: [B, D].

    Inputs are expected to be L2-normalized embeddings (as in the original
    training code); un-normalized inputs can overflow exp(. / T), matching the
    PyTorch reference behaviour.
    """
    B, D = x.shape
    assert B % 2 == 0, "batch must be even (first/second halves are pairs)"
    if gram_in_bf16:
        # Halves resident-x VMEM/DMA and runs the MXU at bf16 rate; f32
        # accumulation is kept in the kernel.  Small accuracy loss vs f32.
        x = x.astype(jnp.bfloat16)
    itemsize = jnp.dtype(x.dtype).itemsize

    gen = _tpu_generation()
    max_tile = 256 if gen in ("v6", "v7") else 128
    row_align = 16 if itemsize == 2 else 8
    tile_b = _pick_row_tile(B, max_tile, row_align)
    n_tiles = B // tile_b

    kernel = _make_batch_criterion_kernel(negM, T, B, tile_b)
    out_shape = jax.ShapeDtypeStruct((n_tiles, 8, 128), jnp.float32)
    vmem_limit = _vmem_limit_bytes(B, D, tile_b, itemsize, gen)

    def run(single_buffer_x: bool):
        if single_buffer_x:
            # Constant-index resident block: single-buffer it (double
            # buffering a block that never changes is pure VMEM waste).
            x_spec = pl.BlockSpec((B, D), lambda i: (0, 0),
                                  pipeline_mode=pl.Buffered(1))
        else:
            x_spec = pl.BlockSpec((B, D), lambda i: (0, 0))
        return pl.pallas_call(
            kernel,
            out_shape=out_shape,
            grid=(n_tiles,),
            in_specs=[x_spec],
            out_specs=pl.BlockSpec((1, 8, 128), lambda i: (i, 0, 0)),
            compiler_params=pltpu.CompilerParams(
                dimension_semantics=("parallel",),
                vmem_limit_bytes=vmem_limit),
        )(x)

    try:
        partials = run(True)
    except Exception:
        # Fallback if this jax build rejects Buffered(1) on a pallas_call spec.
        partials = run(False)

    return -jnp.sum(partials[:, 0, 0]) / B


def batch_criterion_ref(x, negM: float, T: float):
    """Pure-JAX reference mirroring the PyTorch code."""
    x = x.astype(jnp.float32)
    B = x.shape[0]
    half = B // 2
    reordered = jnp.concatenate([x[half:], x[:half]], axis=0)
    pos = jnp.exp(jnp.sum(x * reordered, axis=1) / T)
    diag_mat = 1.0 - jnp.eye(B, dtype=jnp.float32)
    all_prob = jnp.exp(x @ x.T / T) * diag_mat
    if negM == 1.0:
        all_div = jnp.sum(all_prob, axis=1)
    else:
        all_div = (jnp.sum(all_prob, axis=1) - pos) * negM + pos
    eps = 1e-10
    lnPmt = pos / (all_div + eps)
    lnPon = jnp.log(1.0 - all_prob / (all_div[:, None] + eps))
    lnPon = jnp.sum(lnPon, axis=1) - jnp.log(1.0 - lnPmt)
    lnPmtsum = jnp.sum(jnp.log(lnPmt))
    lnPonsum = jnp.sum(lnPon) * negM
    return -(lnPmtsum + lnPonsum) / B


if __name__ == "__main__":
    # BatchCriterion has no learnable parameters; only hyperparams negM, T.
    B, D = 16, 32   # batch must be even (first/second halves are positive pairs)

    key = jax.random.PRNGKey(0)
    x = jax.random.normal(key, (B, D), dtype=jnp.float32)
    # embeddings are L2-normalized before this loss
    x = x / jnp.linalg.norm(x, axis=1, keepdims=True)

    # (negM, T) pairs exercise both all_div branches and are chosen so the loss
    # is mathematically finite at this small batch size: with negM < 1 and a
    # very small T a single dominant negative makes log(1 - all_prob/all_div)
    # = log(<=0) (NaN) in the reference formulation itself, which is what
    # tripped the previous run.
    for negM, T in ((1.0, 0.1), (0.5, 1.0)):
        loss = jax.block_until_ready(batch_criterion(x, negM, T))
        loss_ref = batch_criterion_ref(x, negM, T)
        assert bool(jnp.isfinite(loss_ref)), (negM, T, float(loss_ref))
        assert bool(jnp.isfinite(loss)), (negM, T, float(loss))
        assert jnp.allclose(loss, loss_ref, rtol=1e-4, atol=1e-4), (
            negM, T, float(loss), float(loss_ref))

    print("KERNEL_OK")
</pallas_src>

<mosaic_0001>
module attributes {stable_mosaic.version = 11 : i64} {
  func.func @kernel(%arg0: i32, %arg1: memref<16x32xf32, #tpu.memory_space<vmem>>, %arg2: memref<1x8x128xf32, #tpu.memory_space<vmem>>) attributes {dimension_semantics = [#tpu.dimension_semantics<parallel>], iteration_bounds = array<i64: 2>, scalar_prefetch = 0 : i64, scratch_operands = 0 : i64, tpu.core_type = #tpu.core_type<tc>, window_params = [{pipeline_mode = #tpu.pipeline_mode<synchronous>, transform_indices = @transform_0, window_bounds = array<i64: 16, 32>}, {transform_indices = @transform_1, window_bounds = array<i64: 1, 8, 128>}]} {
    %c0 = arith.constant 0 : index
    %c0_0 = arith.constant 0 : index
    %0 = vector.load %arg1[%c0, %c0_0] : memref<16x32xf32, #tpu.memory_space<vmem>>, vector<16x32xf32>
    %c8_i32 = arith.constant 8 : i32
    %1 = arith.muli %arg0, %c8_i32 : i32
    %2 = tpu.assume_multiple %1, 8 : i32
    %3 = arith.index_cast %2 : i32 to index
    %c0_1 = arith.constant 0 : index
    %4 = vector.load %arg1[%3, %c0_1] : memref<16x32xf32, #tpu.memory_space<vmem>>, vector<8x32xf32>
    %cst = arith.constant dense<0.000000e+00> : vector<8x16xf32>
    %5 = tpu.matmul %4, %0, %cst {dimension_numbers = #tpu.dot_dimension_numbers<[1], [1], [0], [0], [0, 0, 1, 0], [], []>} : vector<8x32xf32>, vector<16x32xf32>, vector<8x16xf32> -> vector<8x16xf32>
    %cst_2 = arith.constant 1.000000e+01 : f32
    %6 = vector.broadcast %cst_2 : f32 to vector<8x16xf32>
    %7 = arith.mulf %5, %6 : vector<8x16xf32>
    %8 = tpu.iota {dimensions = array<i32: 0>} : vector<8x16xi32>
    %9 = tpu.iota {dimensions = array<i32: 1>} : vector<8x16xi32>
    %10 = arith.subi %8, %9 : vector<8x16xi32>
    %c8_i32_3 = arith.constant 8 : i32
    %11 = arith.muli %arg0, %c8_i32_3 : i32
    %12 = vector.broadcast %11 : i32 to vector<8x16xi32>
    %13 = arith.addi %10, %12 : vector<8x16xi32>
    %c0_i32 = arith.constant 0 : i32
    %14 = vector.broadcast %c0_i32 : i32 to vector<8x16xi32>
    %15 = arith.cmpi eq, %13, %14 : vector<8x16xi32>
    %16 = math.exp %7 : vector<8x16xf32>
    %cst_4 = arith.constant 0.000000e+00 : f32
    %17 = vector.broadcast %cst_4 : f32 to vector<8x16xf32>
    %18 = arith.select %15, %17, %16 : vector<8x16xi1>, vector<8x16xf32>
    %c8_i32_5 = arith.constant 8 : i32
    %19 = vector.broadcast %c8_i32_5 : i32 to vector<8x16xi32>
    %20 = arith.cmpi eq, %13, %19 : vector<8x16xi32>
    %c-8_i32 = arith.constant -8 : i32
    %21 = vector.broadcast %c-8_i32 : i32 to vector<8x16xi32>
    %22 = arith.cmpi eq, %13, %21 : vector<8x16xi32>
    %23 = arith.ori %20, %22 : vector<8x16xi1>
    %cst_6 = arith.constant 0.000000e+00 : f32
    %24 = vector.broadcast %cst_6 : f32 to vector<8x16xf32>
    %25 = arith.select %23, %18, %24 : vector<8x16xi1>, vector<8x16xf32>
    %cst_7 = arith.constant dense<0.000000e+00> : vector<8xf32>
    %26 = vector.multi_reduction <add>, %25, %cst_7 [1] : vector<8x16xf32> to vector<8xf32>
    %27 = vector.shape_cast %26 : vector<8xf32> to vector<8x1xf32>
    %cst_8 = arith.constant 0.000000e+00 : f32
    %28 = vector.broadcast %cst_8 : f32 to vector<8x16xf32>
    %29 = arith.select %23, %7, %28 : vector<8x16xi1>, vector<8x16xf32>
    %cst_9 = arith.constant dense<0.000000e+00> : vector<8xf32>
    %30 = vector.multi_reduction <add>, %29, %cst_9 [1] : vector<8x16xf32> to vector<8xf32>
    %31 = vector.shape_cast %30 : vector<8xf32> to vector<8x1xf32>
    %cst_10 = arith.constant dense<0.000000e+00> : vector<8xf32>
    %32 = vector.multi_reduction <add>, %18, %cst_10 [1] : vector<8x16xf32> to vector<8xf32>
    %33 = vector.shape_cast %32 : vector<8xf32> to vector<8x1xf32>
    %cst_11 = arith.constant 1.000000e-10 : f32
    %34 = vector.broadcast %cst_11 : f32 to vector<8x1xf32>
    %35 = arith.addf %33, %34 : vector<8x1xf32>
    %cst_12 = arith.constant 1.000000e+00 : f32
    %36 = vector.broadcast %cst_12 : f32 to vector<8x1xf32>
    %37 = arith.divf %36, %35 : vector<8x1xf32>
    %38 = math.log %35 : vector<8x1xf32>
    %39 = arith.subf %31, %38 : vector<8x1xf32>
    %40 = vector.shape_cast %39 : vector<8x1xf32> to vector<1x8x1xf32>
    %cst_13 = arith.constant dense<0.000000e+00> : vector<1xf32>
    %41 = vector.multi_reduction <add>, %40, %cst_13 [1, 2] : vector<1x8x1xf32> to vector<1xf32>
    %42 = vector.shape_cast %41 : vector<1xf32> to vector<1x1x1xf32>
    %43 = vector.extract %42[0, 0, 0] : f32 from vector<1x1x1xf32>
    %44 = vector.broadcast %37 : vector<8x1xf32> to vector<8x16xf32>
    %45 = arith.mulf %18, %44 : vector<8x16xf32>
    %cst_14 = arith.constant 1.000000e+00 : f32
    %46 = vector.broadcast %cst_14 : f32 to vector<8x16xf32>
    %47 = arith.subf %46, %45 : vector<8x16xf32>
    %48 = math.log %47 : vector<8x16xf32>
    %cst_15 = arith.constant dense<0.000000e+00> : vector<8xf32>
    %49 = vector.multi_reduction <add>, %48, %cst_15 [1] : vector<8x16xf32> to vector<8xf32>
    %50 = vector.shape_cast %49 : vector<8xf32> to vector<8x1xf32>
    %51 = arith.mulf %27, %37 : vector<8x1xf32>
    %cst_16 = arith.constant 1.000000e+00 : f32
    %52 = vector.broadcast %cst_16 : f32 to vector<8x1xf32>
    %53 = arith.subf %52, %51 : vector<8x1xf32>
    %54 = math.log %53 : vector<8x1xf32>
    %55 = arith.subf %50, %54 : vector<8x1xf32>
    %56 = vector.shape_cast %55 : vector<8x1xf32> to vector<1x8x1xf32>
    %cst_17 = arith.constant dense<0.000000e+00> : vector<1xf32>
    %57 = vector.multi_reduction <add>, %56, %cst_17 [1, 2] : vector<1x8x1xf32> to vector<1xf32>
    %58 = vector.shape_cast %57 : vector<1xf32> to vector<1x1x1xf32>
    %59 = vector.extract %58[0, 0, 0] : f32 from vector<1x1x1xf32>
    %cst_18 = arith.constant 1.000000e+00 : f32
    %60 = arith.mulf %cst_18, %59 : f32
    %61 = arith.addf %43, %60 : f32
    %62 = vector.broadcast %61 : f32 to vector<1x8x128xf32>
    %c0_19 = arith.constant 0 : index
    %c0_20 = arith.constant 0 : index
    %c0_21 = arith.constant 0 : index
    %63 = vector.load %arg2[%c0_19, %c0_20, %c0_21] : memref<1x8x128xf32, #tpu.memory_space<vmem>>, vector<1x8x128xf32>
    tpu.vector_store %arg2[%c0_19, %c0_20, %c0_21], %62 {strides = array<i32>} : memref<1x8x128xf32, #tpu.memory_space<vmem>>, vector<1x8x128xf32>,
    return
  }
  func.func @transform_0(%arg0: i32) -> (i32, i32) {
    %c0_i32 = arith.constant 0 : i32
    %c0_i32_0 = arith.constant 0 : i32
    %c0_i32_1 = arith.constant 0 : i32
    return %c0_i32, %c0_i32_0 : i32, i32
  }
  func.func @transform_1(%arg0: i32) -> (i32, i32, i32) {
    %c0_i32 = arith.constant 0 : i32
    %c0_i32_0 = arith.constant 0 : i32
    %c0_i32_1 = arith.constant 0 : i32
    return %arg0, %c0_i32, %c0_i32_0 : i32, i32, i32
  }
}

module attributes {stable_mosaic.version = 11 : i64} {
  func.func @kernel(%arg0: i32, %arg1: memref<16x32xf32, #tpu.memory_space<vmem>>, %arg2: memref<1x8x128xf32, #tpu.memory_space<vmem>>) attributes {dimension_semantics = [#tpu.dimension_semantics<parallel>], iteration_bounds = array<i64: 2>, scalar_prefetch = 0 : i64, scratch_operands = 0 : i64, tpu.core_type = #tpu.core_type<tc>, window_params = [{pipeline_mode = #tpu.pipeline_mode<synchronous>, transform_indices = @transform_0, window_bounds = array<i64: 16, 32>}, {transform_indices = @transform_1, window_bounds = array<i64: 1, 8, 128>}]} {
    %c0 = arith.constant 0 : index
    %c0_0 = arith.constant 0 : index
    %0 = vector.load %arg1[%c0, %c0_0] : memref<16x32xf32, #tpu.memory_space<vmem>>, vector<16x32xf32>
    %c8_i32 = arith.constant 8 : i32
    %1 = arith.muli %arg0, %c8_i32 : i32
    %2 = tpu.assume_multiple %1, 8 : i32
    %3 = arith.index_cast %2 : i32 to index
    %c0_1 = arith.constant 0 : index
    %4 = vector.load %arg1[%3, %c0_1] : memref<16x32xf32, #tpu.memory_space<vmem>>, vector<8x32xf32>
    %cst = arith.constant dense<0.000000e+00> : vector<8x16xf32>
    %5 = tpu.matmul %4, %0, %cst {dimension_numbers = #tpu.dot_dimension_numbers<[1], [1], [0], [0], [0, 0, 1, 0], [], []>} : vector<8x32xf32>, vector<16x32xf32>, vector<8x16xf32> -> vector<8x16xf32>
    %cst_2 = arith.constant 1.000000e+01 : f32
    %6 = vector.broadcast %cst_2 : f32 to vector<8x16xf32>
    %7 = arith.mulf %5, %6 : vector<8x16xf32>
    %8 = tpu.iota {dimensions = array<i32: 0>} : vector<8x16xi32>
    %9 = tpu.iota {dimensions = array<i32: 1>} : vector<8x16xi32>
    %10 = arith.subi %8, %9 : vector<8x16xi32>
    %c8_i32_3 = arith.constant 8 : i32
    %11 = arith.muli %arg0, %c8_i32_3 : i32
    %12 = vector.broadcast %11 : i32 to vector<8x16xi32>
    %13 = arith.addi %10, %12 : vector<8x16xi32>
    %c0_i32 = arith.constant 0 : i32
    %14 = vector.broadcast %c0_i32 : i32 to vector<8x16xi32>
    %15 = arith.cmpi eq, %13, %14 : vector<8x16xi32>
    %16 = math.exp %7 : vector<8x16xf32>
    %cst_4 = arith.constant 0.000000e+00 : f32
    %17 = vector.broadcast %cst_4 : f32 to vector<8x16xf32>
    %18 = arith.select %15, %17, %16 : vector<8x16xi1>, vector<8x16xf32>
    %c8_i32_5 = arith.constant 8 : i32
    %19 = vector.broadcast %c8_i32_5 : i32 to vector<8x16xi32>
    %20 = arith.cmpi eq, %13, %19 : vector<8x16xi32>
    %c-8_i32 = arith.constant -8 : i32
    %21 = vector.broadcast %c-8_i32 : i32 to vector<8x16xi32>
    %22 = arith.cmpi eq, %13, %21 : vector<8x16xi32>
    %23 = arith.ori %20, %22 : vector<8x16xi1>
    %cst_6 = arith.constant 0.000000e+00 : f32
    %24 = vector.broadcast %cst_6 : f32 to vector<8x16xf32>
    %25 = arith.select %23, %18, %24 : vector<8x16xi1>, vector<8x16xf32>
    %cst_7 = arith.constant dense<0.000000e+00> : vector<8xf32>
    %26 = vector.multi_reduction <add>, %25, %cst_7 [1] : vector<8x16xf32> to vector<8xf32>
    %27 = vector.shape_cast %26 : vector<8xf32> to vector<8x1xf32>
    %cst_8 = arith.constant 0.000000e+00 : f32
    %28 = vector.broadcast %cst_8 : f32 to vector<8x16xf32>
    %29 = arith.select %23, %7, %28 : vector<8x16xi1>, vector<8x16xf32>
    %cst_9 = arith.constant dense<0.000000e+00> : vector<8xf32>
    %30 = vector.multi_reduction <add>, %29, %cst_9 [1] : vector<8x16xf32> to vector<8xf32>
    %31 = vector.shape_cast %30 : vector<8xf32> to vector<8x1xf32>
    %cst_10 = arith.constant dense<0.000000e+00> : vector<8xf32>
    %32 = vector.multi_reduction <add>, %18, %cst_10 [1] : vector<8x16xf32> to vector<8xf32>
    %33 = vector.shape_cast %32 : vector<8xf32> to vector<8x1xf32>
    %cst_11 = arith.constant 1.000000e-10 : f32
    %34 = vector.broadcast %cst_11 : f32 to vector<8x1xf32>
    %35 = arith.addf %33, %34 : vector<8x1xf32>
    %cst_12 = arith.constant 1.000000e+00 : f32
    %36 = vector.broadcast %cst_12 : f32 to vector<8x1xf32>
    %37 = arith.divf %36, %35 : vector<8x1xf32>
    %38 = math.log %35 : vector<8x1xf32>
    %39 = arith.subf %31, %38 : vector<8x1xf32>
    %40 = vector.shape_cast %39 : vector<8x1xf32> to vector<1x8x1xf32>
    %cst_13 = arith.constant dense<0.000000e+00> : vector<1xf32>
    %41 = vector.multi_reduction <add>, %40, %cst_13 [1, 2] : vector<1x8x1xf32> to vector<1xf32>
    %42 = vector.shape_cast %41 : vector<1xf32> to vector<1x1x1xf32>
    %43 = vector.extract %42[0, 0, 0] : f32 from vector<1x1x1xf32>
    %44 = vector.broadcast %37 : vector<8x1xf32> to vector<8x16xf32>
    %45 = arith.mulf %18, %44 : vector<8x16xf32>
    %cst_14 = arith.constant 1.000000e+00 : f32
    %46 = vector.broadcast %cst_14 : f32 to vector<8x16xf32>
    %47 = arith.subf %46, %45 : vector<8x16xf32>
    %48 = math.log %47 : vector<8x16xf32>
    %cst_15 = arith.constant dense<0.000000e+00> : vector<8xf32>
    %49 = vector.multi_reduction <add>, %48, %cst_15 [1] : vector<8x16xf32> to vector<8xf32>
    %50 = vector.shape_cast %49 : vector<8xf32> to vector<8x1xf32>
    %51 = arith.mulf %27, %37 : vector<8x1xf32>
    %cst_16 = arith.constant 1.000000e+00 : f32
    %52 = vector.broadcast %cst_16 : f32 to vector<8x1xf32>
    %53 = arith.subf %52, %51 : vector<8x1xf32>
    %54 = math.log %53 : vector<8x1xf32>
    %55 = arith.subf %50, %54 : vector<8x1xf32>
    %56 = vector.shape_cast %55 : vector<8x1xf32> to vector<1x8x1xf32>
    %cst_17 = arith.constant dense<0.000000e+00> : vector<1xf32>
    %57 = vector.multi_reduction <add>, %56, %cst_17 [1, 2] : vector<1x8x1xf32> to vector<1xf32>
    %58 = vector.shape_cast %57 : vector<1xf32> to vector<1x1x1xf32>
    %59 = vector.extract %58[0, 0, 0] : f32 from vector<1x1x1xf32>
    %cst_18 = arith.constant 1.000000e+00 : f32
    %60 = arith.mulf %cst_18, %59 : f32
    %61 = arith.addf %43, %60 : f32
    %62 = vector.broadcast %61 : f32 to vector<1x8x128xf32>
    %c0_19 = arith.constant 0 : index
    %c0_20 = arith.constant 0 : index
    %c0_21 = arith.constant 0 : index
    %63 = vector.load %arg2[%c0_19, %c0_20, %c0_21] : memref<1x8x128xf32, #tpu.memory_space<vmem>>, vector<1x8x128xf32>
    tpu.vector_store %arg2[%c0_19, %c0_20, %c0_21], %62 {strides = array<i32>} : memref<1x8x128xf32, #tpu.memory_space<vmem>>, vector<1x8x128xf32>,
    return
  }
  func.func @transform_0(%arg0: i32) -> (i32, i32) {
    %c0_i32 = arith.constant 0 : i32
    %c0_i32_0 = arith.constant 0 : i32
    %c0_i32_1 = arith.constant 0 : i32
    return %c0_i32, %c0_i32_0 : i32, i32
  }
  func.func @transform_1(%arg0: i32) -> (i32, i32, i32) {
    %c0_i32 = arith.constant 0 : i32
    %c0_i32_0 = arith.constant 0 : i32
    %c0_i32_1 = arith.constant 0 : i32
    return %arg0, %c0_i32, %c0_i32_0 : i32, i32, i32
  }
}

</mosaic_0001>

<llo_original>
// kernel: tpu_custom_call.1
$region0: #{tpu_custom_call.1}
  #allocation0 [shape = 'u32[]', space=smem, size = 0x4, offset = 0x4, fixed_abs, tag = 'smem constant byte address 0x4 - core index']
  #allocation1 [shape = 'u32[144,128]{1,0:T(1,128)}', space=vmem, size = 0x12000, scoped, tag = 'internal scratch']
  %s0 = inlined_call_operand.hbm [shape: f32[16,32], index: 0, kind: input, shape index: {}]
  %s1 = inlined_call_operand.hbm [shape: f32[2,8,128], index: 1, kind: output, shape index: {}]
  %s2 = sld [smem:[#allocation0]]
  $region41: #{tpu_custom_call.1} parent=0
    _
  %s4 = ssub.s32 1, %s2
  %s5 = scalar_select 0, %s4, %s2
  $region1: #{tpu_custom_call.1} parent=0
    #allocation2 [shape = 'u8[8192]{0}', space=vmem, size = 0x2000, scoped, tag = 'input window, operand 0, single buffered']
    #allocation3 [shape = 's32[2]{0}', space=sflag, size = 0x8, scoped, tag = 'scoped memory for tpu_custom_call.1']
    #allocation4 [shape = 's32[2]{0}', space=sflag, size = 0x8, scoped, tag = 'scoped memory for tpu_custom_call.1']
    #allocation5 [shape = 'u8[8192]{0}', space=vmem, size = 0x2000, scoped, tag = 'output window, operand 0']
    %6 = vsyncpa [#allocation3], 0
    %7 = vsyncpa [#allocation4], 0
    %s8 = scalar_lea.sflag [#allocation4], 1
    %9 = vsyncpa %s8, 0
    loop: start=0, step=1, limit=4
    $region2: #{tpu_custom_call.1} parent=1 // loop_pre_header
      _
    $region3: #{tpu_custom_call.1} parent=1 // loop_header
      %s11 = sphi 0, %s15
      %p12 = scmp.ge.s32.totalorder %s11, 4
      %s19 = sphi 0, %s19
      %s21 = sphi 0, %s19
      %s22 = sphi 0, %s21
      %s36 = sphi 0, %s22
      %s42 = sphi 0, %s44
      %s45 = sphi 0, %s42
      %s46 = sphi 0, %s45
      %s62 = sphi 0, %s46
    $region4: #{tpu_custom_call.1} parent=1 // loop_header_branch
      %14 = sbr.rel (%p12) target = $region8
    $region5: #{tpu_custom_call.1} parent=1 // loop_body
      %s16 = ssub.s32 %s11, 1
      %s17 = ssub.s32 %s11, 2
      %s18 = sadd.s32 %s11, 1
      %s20 = sadd.s32 %s19, 1
      %p23 = scmp.eq.s32.totalorder %s11, 1
      %p24 = scmp.ne.s32.totalorder %s19, %s21
      %p25 = scmp.eq.s32.totalorder %s11, 0
      %p26 = por %p24, %p25
      %p27 = scmp.ne.s32.totalorder %s19, %s21
      %p28 = scmp.eq.s32.totalorder %s16, 1
      %p29 = por %p27, %p28
      %p30 = scmp.ne.s32.totalorder %s21, %s22
      %p31 = scmp.eq.s32.totalorder %s16, 0
      %p32 = por %p30, %p31
      %p33 = scmp.ne.s32.totalorder %s21, %s22
      %p34 = scmp.eq.s32.totalorder %s17, 1
      %p35 = por %p33, %p34
      %p37 = scmp.ne.s32.totalorder %s22, %s36
      %p38 = scmp.eq.s32.totalorder %s17, 0
      %p39 = por %p37, %p38
      %s40 = ssub.s32 %s11, %s18
      %p41 = scmp.eq.s32.totalorder %s40, 0
      %s43 = sadd.s32 %s42, 1
      %s44 = scalar_select %p41, %s42, %s43
      %p47 = pneg %p41
      %p48 = scmp.eq.s32.totalorder %s11, 1
      %p49 = por %p47, %p48
      %p50 = scmp.ne.s32.totalorder %s42, %s45
      %p51 = scmp.eq.s32.totalorder %s11, 0
      %p52 = por %p50, %p51
      %p53 = scmp.ne.s32.totalorder %s42, %s45
      %p54 = scmp.eq.s32.totalorder %s16, 1
      %p55 = por %p53, %p54
      %p56 = scmp.ne.s32.totalorder %s45, %s46
      %p57 = scmp.eq.s32.totalorder %s16, 0
      %p58 = por %p56, %p57
      %p59 = scmp.ne.s32.totalorder %s45, %s46
      %p60 = scmp.eq.s32.totalorder %s17, 1
      %p61 = por %p59, %p60
      %p63 = scmp.ne.s32.totalorder %s46, %s62
      %p64 = scmp.eq.s32.totalorder %s17, 0
      %p65 = por %p63, %p64
      %p66 = scmp.le.s32.totalorder 1, %s11
      %p67 = scmp.lt.s32.totalorder %s11, 3
      %p68 = pnand %p66, %p67
      %p69 = pneg %p68
      // Predicated region
      $region9: #{tpu_custom_call.1} parent=5 // pred_check
        _
      $region10: #{tpu_custom_call.1} parent=5 // pred_check_branch
        %71 = sbr.rel (%p68) target = $region12
      $region11: #{tpu_custom_call.1} parent=5 // pred_region
        %s72 = ssub.s32 %s11, 1
        // Predicated region
        $region13: #{tpu_custom_call.1} parent=11 // pred_check
          %p73 = pneg %p32
        $region14: #{tpu_custom_call.1} parent=11 // pred_check_branch
          %75 = sbr.rel (%p73) target = $region16
        $region15: #{tpu_custom_call.1} parent=11 // pred_region
          %s77 = ssub.s32 256, 256
          %78 = vsyncadd [#allocation3], %s77
          %s79 = sshll.u32 [#allocation2], 4
          %s80 = int_to_ptr.vmem [resolvable:$true] %s79
          %85 = dma.hbm_to_vmem [thread:$0]  %s0, 256, %s80, [#allocation3], 128, 128, 8
        $region16: #{tpu_custom_call.1} parent=11 // pred_fallthru
          _
      $region12: #{tpu_custom_call.1} parent=5 // pred_fallthru
        _
      %p86 = scmp.lt.s32.totalorder %s11, 2
      // Predicated region
      $region17: #{tpu_custom_call.1} parent=5 // pred_check
        %p87 = pneg %p86
      $region18: #{tpu_custom_call.1} parent=5 // pred_check_branch
        %89 = sbr.rel (%p87) target = $region20
      $region19: #{tpu_custom_call.1} parent=5 // pred_region
        _
      $region20: #{tpu_custom_call.1} parent=5 // pred_fallthru
        _
      %p90 = scmp.le.s32.totalorder 1, %s11
      %p91 = scmp.lt.s32.totalorder %s11, 3
      %p92 = pnand %p90, %p91
      %p93 = pneg %p92
      // Predicated region
      $region21: #{tpu_custom_call.1} parent=5 // pred_check
        _
      $region22: #{tpu_custom_call.1} parent=5 // pred_check_branch
        %95 = sbr.rel (%p92) target = $region24
      $region23: #{tpu_custom_call.1} parent=5 // pred_region
        %s96 = ssub.s32 %s11, 1
        // Predicated region
        $region25: #{tpu_custom_call.1} parent=23 // pred_check
          %p97 = pneg %p32
        $region26: #{tpu_custom_call.1} parent=23 // pred_check_branch
          %99 = sbr.rel (%p97) target = $region28
        $region27: #{tpu_custom_call.1} parent=23 // pred_region
          %100 = dma.done [#allocation3], 256
        $region28: #{tpu_custom_call.1} parent=23 // pred_fallthru
          _
        %p101 = pneg %p32
        %p102 = pneg %p29
        %p103 = pneg %p58
        %p104 = pneg %p55
        %s105 = sand.u32 %s45, 1
        %s106 = scalar_lea.sflag [#allocation4], %s105
        %s107 = sand.u32 %s45, 1
        %s108 = smul.addr %s107, 8
        %s109 = scalar_lea.vmem [#allocation5], %s108
        %v110 = vld [vmem:[#allocation2] sm:$0xff]
        %v111 = vld [vmem:[#allocation2 + $0x8] sm:$0xff]
        %s112 = smul.u32 %s16, 8
        %s113 = scalar_lea.vmem [#allocation2], %s112
        %v114 = vld [vmem:[%s113] sm:$0xff]
        %vm115 = vcmask 261120
        %v117 = vsel %vm115, %v114, 0
        %v120 = vsel %vm115, %v110, 0
        %v123 = vsel %vm115, %v111, 0
        %125 = vmatprep.subr.mxu0 0.0
        %126 = vmatpush1.xpose.msra.mxu0 %v120
        %127 = vmatprep.subr.mxu0 0.0
        %128 = vmatpush1.xpose.msra.mxu0 %v123
        %129 = vmatprep.subr.mxu0 0.0
        %130 = vmatpush1.xpose.msra.mxu0 0.0
        %131 = vmatprep.subr.mxu0 0.0
        %132 = vmatpush1.xpose.msra.mxu0 0.0
        %133 = vmatprep.subr.mxu0 0.0
        %134 = vmatpush1.xpose.msra.mxu0 0.0
        %135 = vmatprep.subr.mxu0 0.0
        %136 = vmatpush1.xpose.msra.mxu0 0.0
        %137 = vmatprep.subr.mxu0 0.0
        %138 = vmatpush1.xpose.msra.mxu0 0.0
        %139 = vmatprep.subr.mxu0 0.0
        %140 = vmatpush1.xpose.msra.mxu0 0.0
        %141 = vmatprep.subr.mxu0 0.0
        %142 = vmatpush1.xpose.msra.mxu0 0.0
        %143 = vmatprep.subr.mxu0 0.0
        %144 = vmatpush1.xpose.msra.mxu0 0.0
        %145 = vmatprep.subr.mxu0 0.0
        %146 = vmatpush1.xpose.msra.mxu0 0.0
        %147 = vmatprep.subr.mxu0 0.0
        %148 = vmatpush1.xpose.msra.mxu0 0.0
        %149 = vmatprep.subr.mxu0 0.0
        %150 = vmatpush1.xpose.msra.mxu0 0.0
        %151 = vmatprep.subr.mxu0 0.0
        %152 = vmatpush1.xpose.msra.mxu0 0.0
        %153 = vmatprep.subr.mxu0 0.0
        %154 = vmatpush1.xpose.msra.mxu0 0.0
        %155 = vmatprep.subr.mxu0 0.0
        %156 = vmatpush1.xpose.msra.mxu0 0.0
        %157 = vmatprep.subr.mxu0 0.0
        %158 = vmatpush1.xpose.msra.mxu0 0.0
        %159 = vmatprep.subr.mxu0 0.0
        %160 = vmatpush1.xpose.msra.mxu0 0.0
        %161 = vmatprep.subr.mxu0 0.0
        %162 = vmatpush1.xpose.msra.mxu0 0.0
        %163 = vmatprep.subr.mxu0 0.0
        %164 = vmatpush1.xpose.msra.mxu0 0.0
        %165 = vmatprep.subr.mxu0 0.0
        %166 = vmatpush1.xpose.msra.mxu0 0.0
        %167 = vmatprep.subr.mxu0 0.0
        %168 = vmatpush1.xpose.msra.mxu0 0.0
        %169 = vmatprep.subr.mxu0 0.0
        %170 = vmatpush1.xpose.msra.mxu0 0.0
        %171 = vmatprep.subr.mxu0 0.0
        %172 = vmatpush1.xpose.msra.mxu0 0.0
        %173 = vmatprep.subr.mxu0 0.0
        %174 = vmatpush1.xpose.msra.mxu0 0.0
        %175 = vmatprep.subr.mxu0 0.0
        %176 = vmatpush1.xpose.msra.mxu0 0.0
        %177 = vmatprep.subr.mxu0 0.0
        %178 = vmatpush1.xpose.msra.mxu0 0.0
        %179 = vmatprep.subr.mxu0 0.0
        %180 = vmatpush1.xpose.msra.mxu0 0.0
        %181 = vmatprep.subr.mxu0 0.0
        %182 = vmatpush1.xpose.msra.mxu0 0.0
        %183 = vmatprep.subr.mxu0 0.0
        %184 = vmatpush1.xpose.msra.mxu0 0.0
        %185 = vmatprep.subr.mxu0 0.0
        %186 = vmatpush1.xpose.msra.mxu0 0.0
        %187 = vmatprep.subr.mxu0 0.0
        %188 = vmatpush1.xpose.msra.mxu0 0.0
        %189 = vmatprep.mubr.f32.mxu0 0.0
        %190 = vmatmul.mubr.f32.gmra.mrb[0].mxu0 %v117
        %v191 = vpop.f32.mrb[0].mxu0
        %v192 = vadd.f32 0.0, %v191
        %v193 = vpop.f32.mrb[0].mxu0
        %194 = vdwg.mxu0
        %v195 = vmul.f32 %v192, 10.0
        %v196 = vlaneseq
        %v197 = vshrl.u32 %v196, 7
        %v198 = vlaneseq
        %v199 = vand.u32 %v198, 127
        %v200 = vsub.s32 %v197, %v199
        %v201 = vstv %s112
        %v202 = vadd.s32 %v200, %v201
        %vm203 = vcmp.eq.s32.totalorder %v202, 0
        %v204 = vmul.f32 %v195, 1.442695
        %v205 = vpow.pop %v204
        %v206 = vsel %vm203, 0.0, %v205
        %vm207 = vcmp.eq.s32.totalorder %v202, 8
        %vm208 = vcmp.eq.s32.totalorder %v202, 4294967288
        %vm209 = vmor %vm207, %vm208
        %v210 = vsel %vm209, %v206, 0.0
        %vm211 = vcmask 130048
        %v212 = vsel %vm211, %v210, 0.0
        %213 = vadd.xlane.f32.xlu0 %v212
        %v214 = vpop.xlane.xlu0 %213
        %v215 = vsel %vm209, %v195, 0.0
        %v216 = vsel %vm211, %v215, 0.0
        %217 = vadd.xlane.f32.xlu0 %v216
        %v218 = vpop.xlane.xlu0 %217
        %v219 = vsel %vm211, %v206, 0.0
        %220 = vadd.xlane.f32.xlu0 %v219
        %v221 = vpop.xlane.xlu0 %220
        %v222 = vadd.f32 %v221, 1e-10
        %v223 = vrcp.pop %v222
        %v224 = vmul.f32 1.0, %v223
        %v225 = vlog2.pop %v222
        %v226 = vmul.f32 %v225, 0.6931472
        %v227 = vsub.f32 %v218, %v226
        %vm228 = vcmask 7168
        %v229 = vsel %vm228, %v227, 0.0
        %230 = vadd.xlane.f32.xlu0 %v229
        %v231 = vpop.xlane.xlu0 %230
        %v232 = vrot.slane %v231, 4
        %v233 = vadd.f32 %v231, %v232
        %v234 = vrot.slane %v233, 2
        %v235 = vadd.f32 %v233, %v234
        %v236 = vrot.slane %v235, 1
        %v237 = vadd.f32 %v235, %v236
        %s238 = vtos %v237
        %v239 = vmul.f32 %v206, %v224
        %v240 = vsub.f32 1.0, %v239
        %v241 = vlog2.pop %v240
        %v242 = vmul.f32 %v241, 0.6931472
        %v243 = vsel %vm211, %v242, 0.0
        %244 = vadd.xlane.f32.xlu0 %v243
        %v245 = vpop.xlane.xlu0 %244
        %v246 = vmul.f32 %v214, %v224
        %v247 = vsub.f32 1.0, %v246
        %v248 = vlog2.pop %v247
        %v249 = vmul.f32 %v248, 0.6931472
        %v250 = vsub.f32 %v245, %v249
        %v251 = vsel %vm228, %v250, 0.0
        %252 = vadd.xlane.f32.xlu0 %v251
        %v253 = vpop.xlane.xlu0 %252
        %v254 = vrot.slane %v253, 4
        %v255 = vadd.f32 %v253, %v254
        %v256 = vrot.slane %v255, 2
        %v257 = vadd.f32 %v255, %v256
        %v258 = vrot.slane %v257, 1
        %v259 = vadd.f32 %v257, %v258
        %s260 = vtos %v259
        %s261 = sadd.f32 %s238, %s260
        %v262 = vstv %s261
        %263 = vst [vmem:[%s109] sm:$0xff] %v262
        %s264 = sand.u32 %s45, 1
        %s265 = scalar_lea.sflag [#allocation4], %s264
        %s266 = sand.u32 %s45, 1
        %s267 = smul.addr %s266, 8
        %s268 = scalar_lea.vmem [#allocation5], %s267
        // Predicated region
        $region29: #{tpu_custom_call.1} parent=23 // pred_check
          %p269 = pneg %p55
        $region30: #{tpu_custom_call.1} parent=23 // pred_check_branch
          %271 = sbr.rel (%p269) target = $region32
        $region31: #{tpu_custom_call.1} parent=23 // pred_region
          %s273 = ssub.s32 128, 128
          %274 = vsyncadd %s265, %s273
          %s275 = smul.addr %s16, 128
          %s276 = scalar_lea.hbm %s1, %s275
          %s278 = sshll.u32 %s268, 4
          %s279 = int_to_ptr.vmem [resolvable:$true] %s278
          %281 = dma.vmem_to_hbm [thread:$0]  %s279, 128, %s276, %s265
        $region32: #{tpu_custom_call.1} parent=23 // pred_fallthru
          _
      $region24: #{tpu_custom_call.1} parent=5 // pred_fallthru
        _
      %p282 = scmp.le.s32.totalorder 2, %s11
      // Predicated region
      $region33: #{tpu_custom_call.1} parent=5 // pred_check
        %p283 = pneg %p282
      $region34: #{tpu_custom_call.1} parent=5 // pred_check_branch
        %285 = sbr.rel (%p283) target = $region36
      $region35: #{tpu_custom_call.1} parent=5 // pred_region
        %s286 = ssub.s32 %s11, 2
        // Predicated region
        $region37: #{tpu_custom_call.1} parent=35 // pred_check
          %p287 = pneg %p61
        $region38: #{tpu_custom_call.1} parent=35 // pred_check_branch
          %289 = sbr.rel (%p287) target = $region40
        $region39: #{tpu_custom_call.1} parent=35 // pred_region
          %s290 = sand.u32 %s46, 1
          %s291 = scalar_lea.sflag [#allocation4], %s290
          %s292 = sand.u32 %s46, 1
          %s293 = smul.addr %s292, 8
          %s294 = scalar_lea.vmem [#allocation5], %s293
          %295 = dma.done %s291, 128
        $region40: #{tpu_custom_call.1} parent=35 // pred_fallthru
          _
      $region36: #{tpu_custom_call.1} parent=5 // pred_fallthru
        _
    $region6: #{tpu_custom_call.1} parent=1 // loop_footer
      %s15 = sadd.s32 1, %s11
    $region7: #{tpu_custom_call.1} parent=1 // loop_footer_branch
      %10 = sbr.rel target = $region3
    $region8: #{tpu_custom_call.1} parent=1 // loop_exit
      _
    %296 = vsyncpa [#allocation3], 1
    %s297 = scalar_lea.sflag [#allocation3], 1
    %298 = vsyncpa %s297, 1
    %299 = vsyncpa [#allocation4], 1
    %s300 = scalar_lea.sflag [#allocation4], 1
    %301 = vsyncpa %s300, 1

// kernel: tpu_custom_call.1
$region0: #{tpu_custom_call.1}
  #allocation0 [shape = 'u32[]', space=smem, size = 0x4, offset = 0x4, fixed_abs, tag = 'smem constant byte address 0x4 - core index']
  #allocation1 [shape = 'u32[144,128]{1,0:T(1,128)}', space=vmem, size = 0x12000, scoped, tag = 'internal scratch']
  %s0 = inlined_call_operand.hbm [shape: f32[16,32], index: 0, kind: input, shape index: {}]
  %s1 = inlined_call_operand.hbm [shape: f32[2,8,128], index: 1, kind: output, shape index: {}]
  %s2 = sld [smem:[#allocation0]]
  $region41: #{tpu_custom_call.1} parent=0
    _
  %s4 = ssub.s32 1, %s2
  %s5 = scalar_select 0, %s4, %s2
  $region1: #{tpu_custom_call.1} parent=0
    #allocation2 [shape = 'u8[8192]{0}', space=vmem, size = 0x2000, scoped, tag = 'input window, operand 0, single buffered']
    #allocation3 [shape = 's32[2]{0}', space=sflag, size = 0x8, scoped, tag = 'scoped memory for tpu_custom_call.1']
    #allocation4 [shape = 's32[2]{0}', space=sflag, size = 0x8, scoped, tag = 'scoped memory for tpu_custom_call.1']
    #allocation5 [shape = 'u8[8192]{0}', space=vmem, size = 0x2000, scoped, tag = 'output window, operand 0']
    %6 = vsyncpa [#allocation3], 0
    %7 = vsyncpa [#allocation4], 0
    %s8 = scalar_lea.sflag [#allocation4], 1
    %9 = vsyncpa %s8, 0
    loop: start=0, step=1, limit=4
    $region2: #{tpu_custom_call.1} parent=1 // loop_pre_header
      _
    $region3: #{tpu_custom_call.1} parent=1 // loop_header
      %s11 = sphi 0, %s15
      %p12 = scmp.ge.s32.totalorder %s11, 4
      %s19 = sphi 0, %s19
      %s21 = sphi 0, %s19
      %s22 = sphi 0, %s21
      %s36 = sphi 0, %s22
      %s42 = sphi 0, %s44
      %s45 = sphi 0, %s42
      %s46 = sphi 0, %s45
      %s62 = sphi 0, %s46
    $region4: #{tpu_custom_call.1} parent=1 // loop_header_branch
      %14 = sbr.rel (%p12) target = $region8
    $region5: #{tpu_custom_call.1} parent=1 // loop_body
      %s16 = ssub.s32 %s11, 1
      %s17 = ssub.s32 %s11, 2
      %s18 = sadd.s32 %s11, 1
      %s20 = sadd.s32 %s19, 1
      %p23 = scmp.eq.s32.totalorder %s11, 1
      %p24 = scmp.ne.s32.totalorder %s19, %s21
      %p25 = scmp.eq.s32.totalorder %s11, 0
      %p26 = por %p24, %p25
      %p27 = scmp.ne.s32.totalorder %s19, %s21
      %p28 = scmp.eq.s32.totalorder %s16, 1
      %p29 = por %p27, %p28
      %p30 = scmp.ne.s32.totalorder %s21, %s22
      %p31 = scmp.eq.s32.totalorder %s16, 0
      %p32 = por %p30, %p31
      %p33 = scmp.ne.s32.totalorder %s21, %s22
      %p34 = scmp.eq.s32.totalorder %s17, 1
      %p35 = por %p33, %p34
      %p37 = scmp.ne.s32.totalorder %s22, %s36
      %p38 = scmp.eq.s32.totalorder %s17, 0
      %p39 = por %p37, %p38
      %s40 = ssub.s32 %s11, %s18
      %p41 = scmp.eq.s32.totalorder %s40, 0
      %s43 = sadd.s32 %s42, 1
      %s44 = scalar_select %p41, %s42, %s43
      %p47 = pneg %p41
      %p48 = scmp.eq.s32.totalorder %s11, 1
      %p49 = por %p47, %p48
      %p50 = scmp.ne.s32.totalorder %s42, %s45
      %p51 = scmp.eq.s32.totalorder %s11, 0
      %p52 = por %p50, %p51
      %p53 = scmp.ne.s32.totalorder %s42, %s45
      %p54 = scmp.eq.s32.totalorder %s16, 1
      %p55 = por %p53, %p54
      %p56 = scmp.ne.s32.totalorder %s45, %s46
      %p57 = scmp.eq.s32.totalorder %s16, 0
      %p58 = por %p56, %p57
      %p59 = scmp.ne.s32.totalorder %s45, %s46
      %p60 = scmp.eq.s32.totalorder %s17, 1
      %p61 = por %p59, %p60
      %p63 = scmp.ne.s32.totalorder %s46, %s62
      %p64 = scmp.eq.s32.totalorder %s17, 0
      %p65 = por %p63, %p64
      %p66 = scmp.le.s32.totalorder 1, %s11
      %p67 = scmp.lt.s32.totalorder %s11, 3
      %p68 = pnand %p66, %p67
      %p69 = pneg %p68
      // Predicated region
      $region9: #{tpu_custom_call.1} parent=5 // pred_check
        _
      $region10: #{tpu_custom_call.1} parent=5 // pred_check_branch
        %71 = sbr.rel (%p68) target = $region12
      $region11: #{tpu_custom_call.1} parent=5 // pred_region
        %s72 = ssub.s32 %s11, 1
        // Predicated region
        $region13: #{tpu_custom_call.1} parent=11 // pred_check
          %p73 = pneg %p32
        $region14: #{tpu_custom_call.1} parent=11 // pred_check_branch
          %75 = sbr.rel (%p73) target = $region16
        $region15: #{tpu_custom_call.1} parent=11 // pred_region
          %s77 = ssub.s32 256, 256
          %78 = vsyncadd [#allocation3], %s77
          %s79 = sshll.u32 [#allocation2], 4
          %s80 = int_to_ptr.vmem [resolvable:$true] %s79
          %85 = dma.hbm_to_vmem [thread:$0]  %s0, 256, %s80, [#allocation3], 128, 128, 8
        $region16: #{tpu_custom_call.1} parent=11 // pred_fallthru
          _
      $region12: #{tpu_custom_call.1} parent=5 // pred_fallthru
        _
      %p86 = scmp.lt.s32.totalorder %s11, 2
      // Predicated region
      $region17: #{tpu_custom_call.1} parent=5 // pred_check
        %p87 = pneg %p86
      $region18: #{tpu_custom_call.1} parent=5 // pred_check_branch
        %89 = sbr.rel (%p87) target = $region20
      $region19: #{tpu_custom_call.1} parent=5 // pred_region
        _
      $region20: #{tpu_custom_call.1} parent=5 // pred_fallthru
        _
      %p90 = scmp.le.s32.totalorder 1, %s11
      %p91 = scmp.lt.s32.totalorder %s11, 3
      %p92 = pnand %p90, %p91
      %p93 = pneg %p92
      // Predicated region
      $region21: #{tpu_custom_call.1} parent=5 // pred_check
        _
      $region22: #{tpu_custom_call.1} parent=5 // pred_check_branch
        %95 = sbr.rel (%p92) target = $region24
      $region23: #{tpu_custom_call.1} parent=5 // pred_region
        %s96 = ssub.s32 %s11, 1
        // Predicated region
        $region25: #{tpu_custom_call.1} parent=23 // pred_check
          %p97 = pneg %p32
        $region26: #{tpu_custom_call.1} parent=23 // pred_check_branch
          %99 = sbr.rel (%p97) target = $region28
        $region27: #{tpu_custom_call.1} parent=23 // pred_region
          %100 = dma.done [#allocation3], 256
        $region28: #{tpu_custom_call.1} parent=23 // pred_fallthru
          _
        %p101 = pneg %p32
        %p102 = pneg %p29
        %p103 = pneg %p58
        %p104 = pneg %p55
        %s105 = sand.u32 %s45, 1
        %s106 = scalar_lea.sflag [#allocation4], %s105
        %s107 = sand.u32 %s45, 1
        %s108 = smul.addr %s107, 8
        %s109 = scalar_lea.vmem [#allocation5], %s108
        %v110 = vld [vmem:[#allocation2] sm:$0xff]
        %v111 = vld [vmem:[#allocation2 + $0x8] sm:$0xff]
        %s112 = smul.u32 %s16, 8
        %s113 = scalar_lea.vmem [#allocation2], %s112
        %v114 = vld [vmem:[%s113] sm:$0xff]
        %vm115 = vcmask 261120
        %v117 = vsel %vm115, %v114, 0
        %v120 = vsel %vm115, %v110, 0
        %v123 = vsel %vm115, %v111, 0
        %125 = vmatprep.subr.mxu0 0.0
        %126 = vmatpush1.xpose.msra.mxu0 %v120
        %127 = vmatprep.subr.mxu0 0.0
        %128 = vmatpush1.xpose.msra.mxu0 %v123
        %129 = vmatprep.subr.mxu0 0.0
        %130 = vmatpush1.xpose.msra.mxu0 0.0
        %131 = vmatprep.subr.mxu0 0.0
        %132 = vmatpush1.xpose.msra.mxu0 0.0
        %133 = vmatprep.subr.mxu0 0.0
        %134 = vmatpush1.xpose.msra.mxu0 0.0
        %135 = vmatprep.subr.mxu0 0.0
        %136 = vmatpush1.xpose.msra.mxu0 0.0
        %137 = vmatprep.subr.mxu0 0.0
        %138 = vmatpush1.xpose.msra.mxu0 0.0
        %139 = vmatprep.subr.mxu0 0.0
        %140 = vmatpush1.xpose.msra.mxu0 0.0
        %141 = vmatprep.subr.mxu0 0.0
        %142 = vmatpush1.xpose.msra.mxu0 0.0
        %143 = vmatprep.subr.mxu0 0.0
        %144 = vmatpush1.xpose.msra.mxu0 0.0
        %145 = vmatprep.subr.mxu0 0.0
        %146 = vmatpush1.xpose.msra.mxu0 0.0
        %147 = vmatprep.subr.mxu0 0.0
        %148 = vmatpush1.xpose.msra.mxu0 0.0
        %149 = vmatprep.subr.mxu0 0.0
        %150 = vmatpush1.xpose.msra.mxu0 0.0
        %151 = vmatprep.subr.mxu0 0.0
        %152 = vmatpush1.xpose.msra.mxu0 0.0
        %153 = vmatprep.subr.mxu0 0.0
        %154 = vmatpush1.xpose.msra.mxu0 0.0
        %155 = vmatprep.subr.mxu0 0.0
        %156 = vmatpush1.xpose.msra.mxu0 0.0
        %157 = vmatprep.subr.mxu0 0.0
        %158 = vmatpush1.xpose.msra.mxu0 0.0
        %159 = vmatprep.subr.mxu0 0.0
        %160 = vmatpush1.xpose.msra.mxu0 0.0
        %161 = vmatprep.subr.mxu0 0.0
        %162 = vmatpush1.xpose.msra.mxu0 0.0
        %163 = vmatprep.subr.mxu0 0.0
        %164 = vmatpush1.xpose.msra.mxu0 0.0
        %165 = vmatprep.subr.mxu0 0.0
        %166 = vmatpush1.xpose.msra.mxu0 0.0
        %167 = vmatprep.subr.mxu0 0.0
        %168 = vmatpush1.xpose.msra.mxu0 0.0
        %169 = vmatprep.subr.mxu0 0.0
        %170 = vmatpush1.xpose.msra.mxu0 0.0
        %171 = vmatprep.subr.mxu0 0.0
        %172 = vmatpush1.xpose.msra.mxu0 0.0
        %173 = vmatprep.subr.mxu0 0.0
        %174 = vmatpush1.xpose.msra.mxu0 0.0
        %175 = vmatprep.subr.mxu0 0.0
        %176 = vmatpush1.xpose.msra.mxu0 0.0
        %177 = vmatprep.subr.mxu0 0.0
        %178 = vmatpush1.xpose.msra.mxu0 0.0
        %179 = vmatprep.subr.mxu0 0.0
        %180 = vmatpush1.xpose.msra.mxu0 0.0
        %181 = vmatprep.subr.mxu0 0.0
        %182 = vmatpush1.xpose.msra.mxu0 0.0
        %183 = vmatprep.subr.mxu0 0.0
        %184 = vmatpush1.xpose.msra.mxu0 0.0
        %185 = vmatprep.subr.mxu0 0.0
        %186 = vmatpush1.xpose.msra.mxu0 0.0
        %187 = vmatprep.subr.mxu0 0.0
        %188 = vmatpush1.xpose.msra.mxu0 0.0
        %189 = vmatprep.mubr.f32.mxu0 0.0
        %190 = vmatmul.mubr.f32.gmra.mrb[0].mxu0 %v117
        %v191 = vpop.f32.mrb[0].mxu0
        %v192 = vadd.f32 0.0, %v191
        %v193 = vpop.f32.mrb[0].mxu0
        %194 = vdwg.mxu0
        %v195 = vmul.f32 %v192, 10.0
        %v196 = vlaneseq
        %v197 = vshrl.u32 %v196, 7
        %v198 = vlaneseq
        %v199 = vand.u32 %v198, 127
        %v200 = vsub.s32 %v197, %v199
        %v201 = vstv %s112
        %v202 = vadd.s32 %v200, %v201
        %vm203 = vcmp.eq.s32.totalorder %v202, 0
        %v204 = vmul.f32 %v195, 1.442695
        %v205 = vpow.pop %v204
        %v206 = vsel %vm203, 0.0, %v205
        %vm207 = vcmp.eq.s32.totalorder %v202, 8
        %vm208 = vcmp.eq.s32.totalorder %v202, 4294967288
        %vm209 = vmor %vm207, %vm208
        %v210 = vsel %vm209, %v206, 0.0
        %vm211 = vcmask 130048
        %v212 = vsel %vm211, %v210, 0.0
        %213 = vadd.xlane.f32.xlu0 %v212
        %v214 = vpop.xlane.xlu0 %213
        %v215 = vsel %vm209, %v195, 0.0
        %v216 = vsel %vm211, %v215, 0.0
        %217 = vadd.xlane.f32.xlu0 %v216
        %v218 = vpop.xlane.xlu0 %217
        %v219 = vsel %vm211, %v206, 0.0
        %220 = vadd.xlane.f32.xlu0 %v219
        %v221 = vpop.xlane.xlu0 %220
        %v222 = vadd.f32 %v221, 1e-10
        %v223 = vrcp.pop %v222
        %v224 = vmul.f32 1.0, %v223
        %v225 = vlog2.pop %v222
        %v226 = vmul.f32 %v225, 0.6931472
        %v227 = vsub.f32 %v218, %v226
        %vm228 = vcmask 7168
        %v229 = vsel %vm228, %v227, 0.0
        %230 = vadd.xlane.f32.xlu0 %v229
        %v231 = vpop.xlane.xlu0 %230
        %v232 = vrot.slane %v231, 4
        %v233 = vadd.f32 %v231, %v232
        %v234 = vrot.slane %v233, 2
        %v235 = vadd.f32 %v233, %v234
        %v236 = vrot.slane %v235, 1
        %v237 = vadd.f32 %v235, %v236
        %s238 = vtos %v237
        %v239 = vmul.f32 %v206, %v224
        %v240 = vsub.f32 1.0, %v239
        %v241 = vlog2.pop %v240
        %v242 = vmul.f32 %v241, 0.6931472
        %v243 = vsel %vm211, %v242, 0.0
        %244 = vadd.xlane.f32.xlu0 %v243
        %v245 = vpop.xlane.xlu0 %244
        %v246 = vmul.f32 %v214, %v224
        %v247 = vsub.f32 1.0, %v246
        %v248 = vlog2.pop %v247
        %v249 = vmul.f32 %v248, 0.6931472
        %v250 = vsub.f32 %v245, %v249
        %v251 = vsel %vm228, %v250, 0.0
        %252 = vadd.xlane.f32.xlu0 %v251
        %v253 = vpop.xlane.xlu0 %252
        %v254 = vrot.slane %v253, 4
        %v255 = vadd.f32 %v253, %v254
        %v256 = vrot.slane %v255, 2
        %v257 = vadd.f32 %v255, %v256
        %v258 = vrot.slane %v257, 1
        %v259 = vadd.f32 %v257, %v258
        %s260 = vtos %v259
        %s261 = sadd.f32 %s238, %s260
        %v262 = vstv %s261
        %263 = vst [vmem:[%s109] sm:$0xff] %v262
        %s264 = sand.u32 %s45, 1
        %s265 = scalar_lea.sflag [#allocation4], %s264
        %s266 = sand.u32 %s45, 1
        %s267 = smul.addr %s266, 8
        %s268 = scalar_lea.vmem [#allocation5], %s267
        // Predicated region
        $region29: #{tpu_custom_call.1} parent=23 // pred_check
          %p269 = pneg %p55
        $region30: #{tpu_custom_call.1} parent=23 // pred_check_branch
          %271 = sbr.rel (%p269) target = $region32
        $region31: #{tpu_custom_call.1} parent=23 // pred_region
          %s273 = ssub.s32 128, 128
          %274 = vsyncadd %s265, %s273
          %s275 = smul.addr %s16, 128
          %s276 = scalar_lea.hbm %s1, %s275
          %s278 = sshll.u32 %s268, 4
          %s279 = int_to_ptr.vmem [resolvable:$true] %s278
          %281 = dma.vmem_to_hbm [thread:$0]  %s279, 128, %s276, %s265
        $region32: #{tpu_custom_call.1} parent=23 // pred_fallthru
          _
      $region24: #{tpu_custom_call.1} parent=5 // pred_fallthru
        _
      %p282 = scmp.le.s32.totalorder 2, %s11
      // Predicated region
      $region33: #{tpu_custom_call.1} parent=5 // pred_check
        %p283 = pneg %p282
      $region34: #{tpu_custom_call.1} parent=5 // pred_check_branch
        %285 = sbr.rel (%p283) target = $region36
      $region35: #{tpu_custom_call.1} parent=5 // pred_region
        %s286 = ssub.s32 %s11, 2
        // Predicated region
        $region37: #{tpu_custom_call.1} parent=35 // pred_check
          %p287 = pneg %p61
        $region38: #{tpu_custom_call.1} parent=35 // pred_check_branch
          %289 = sbr.rel (%p287) target = $region40
        $region39: #{tpu_custom_call.1} parent=35 // pred_region
          %s290 = sand.u32 %s46, 1
          %s291 = scalar_lea.sflag [#allocation4], %s290
          %s292 = sand.u32 %s46, 1
          %s293 = smul.addr %s292, 8
          %s294 = scalar_lea.vmem [#allocation5], %s293
          %295 = dma.done %s291, 128
        $region40: #{tpu_custom_call.1} parent=35 // pred_fallthru
          _
      $region36: #{tpu_custom_call.1} parent=5 // pred_fallthru
        _
    $region6: #{tpu_custom_call.1} parent=1 // loop_footer
      %s15 = sadd.s32 1, %s11
    $region7: #{tpu_custom_call.1} parent=1 // loop_footer_branch
      %10 = sbr.rel target = $region3
    $region8: #{tpu_custom_call.1} parent=1 // loop_exit
      _
    %296 = vsyncpa [#allocation3], 1
    %s297 = scalar_lea.sflag [#allocation3], 1
    %298 = vsyncpa %s297, 1
    %299 = vsyncpa [#allocation4], 1
    %s300 = scalar_lea.sflag [#allocation4], 1
    %301 = vsyncpa %s300, 1

</llo_original>
